<compile_context>
chip_gen: v5e
topology: v5e:2x2
jax: 0.10.0
libtpu: 0.0.40
codegen_flags: <defaults>
</compile_context>

<pallas_src>
import functools

import jax
import jax.numpy as jnp
from jax import lax
from jax.experimental import pallas as pl
from jax.experimental.pallas import tpu as pltpu


def _cross_entropy_kernel(n_total, tile_n, logits_ref, target_ref, psum_ref):
    # logits_ref: (TILE_N, C) native-dtype VMEM tile
    # target_ref: (TILE_N, 1) int32 VMEM tile
    # psum_ref:   (1, 8, 128) float32 per-tile partial-sum block
    raw = logits_ref[...]                                   # native dtype, no f32 copy
    tgt = target_ref[...]                                   # (TILE_N, 1)
    tn, c = raw.shape

    # Row max in the native dtype (max ordering is exact in bf16/f32).
    m = jnp.max(raw, axis=-1, keepdims=True)                # (TILE_N, 1)
    m_f32 = m.astype(jnp.float32)

    # Numerically-stable sum(exp(x - m)); the f32 upcast/subtract is ephemeral
    # and feeds only exp, so no full-tile f32 temporary is kept live.
    sumexp = jnp.sum(jnp.exp(raw.astype(jnp.float32) - m_f32),
                     axis=-1, keepdims=True)                # (TILE_N, 1)

    # Fused gather of the target logit via lane compare + select (no one-hot matmul),
    # done on the raw (native-dtype) tile.
    cls_ids = lax.broadcasted_iota(jnp.int32, (tn, c), 1)   # (TILE_N, C)
    tgt_logit = jnp.sum(
        jnp.where(cls_ids == tgt, raw, jnp.zeros_like(raw)).astype(jnp.float32),
        axis=-1, keepdims=True)                             # (TILE_N, 1)

    # nll = logsumexp(x) - x[tgt] = log(sumexp) + m - x[tgt]
    nll = jnp.log(sumexp) + m_f32 - tgt_logit               # (TILE_N, 1)

    # Mask rows past the true batch size (the ragged last tile reads padded /
    # undefined rows; mandatory now that we emit per-tile partial sums).
    row = lax.broadcasted_iota(jnp.int32, (tn, 1), 0) + pl.program_id(0) * tile_n
    nll = jnp.where(row < n_total, nll, 0.0)

    # One dense (8,128) store per tile instead of TILE_N/8 masked 1-lane stores.
    psum_ref[...] = jnp.broadcast_to(jnp.sum(nll), (1, 8, 128))


def _tpu_generation_config():
    """Returns (target logits-tile bytes, scoped VMEM limit, min #tiles)."""
    try:
        kind = jax.devices()[0].device_kind.lower()
    except Exception:  # pragma: no cover - be robust to odd backends
        kind = ""
    if "v7" in kind or "7x" in kind:
        # 64 MiB VMEM per TC, 2 TensorCores: smaller tiles, want >=4 tiles so
        # the "parallel" axis actually spreads work across both cores.
        return 5 * 1024 * 1024, 48 * 1024 * 1024, 4
    if "v6" in kind:
        # 128 MiB physical VMEM, ~1.4 TB/s HBM: big tiles, generous scoped limit.
        return 8 * 1024 * 1024, 80 * 1024 * 1024, 1
    if "v5" in kind:
        # 128 MiB physical VMEM, ~820 GB/s HBM, scoped default only 16 MiB.
        return 8 * 1024 * 1024, 64 * 1024 * 1024, 1
    return 6 * 1024 * 1024, 48 * 1024 * 1024, 2


_MAX_TILE_ROWS = 32768  # keeps (TILE_N, 1) intermediates / iotas at a sane layout cost


def _round_up(x, m):
    return ((x + m - 1) // m) * m


def _choose_tile_n(n, c, itemsize, target_bytes, min_tiles):
    """Pick TILE_N (multiple of 8): byte-sized tiles, capped for dual-TC split."""
    row_bytes = max(1, c * itemsize)
    tile = (target_bytes // row_bytes) // 8 * 8
    tile = max(8, min(tile, _MAX_TILE_ROWS))
    tile = min(tile, _round_up(n, 8))           # no need to exceed the batch
    if min_tiles > 1:
        tile = min(tile, max(8, _round_up(pl.cdiv(n, min_tiles), 8)))
    return max(8, tile)


def cross_entropy_loss(logits, targets):
    """Equivalent of torch.nn.functional.cross_entropy(logits, targets).

    logits:  (N, C) float array of unnormalized scores (any float dtype)
    targets: (N,)   integer class indices
    returns: scalar float32 mean loss
    """
    n, c = logits.shape
    itemsize = jnp.dtype(logits.dtype).itemsize
    target_bytes, vmem_limit, min_tiles = _tpu_generation_config()
    tile_n = _choose_tile_n(n, c, itemsize, target_bytes, min_tiles)
    num_tiles = pl.cdiv(n, tile_n)

    tgt2d = targets.astype(jnp.int32).reshape(n, 1)

    psums = pl.pallas_call(
        functools.partial(_cross_entropy_kernel, n, tile_n),
        out_shape=jax.ShapeDtypeStruct((num_tiles, 8, 128), jnp.float32),
        grid=(num_tiles,),
        in_specs=[
            pl.BlockSpec((tile_n, c), lambda i: (i, 0)),
            pl.BlockSpec((tile_n, 1), lambda i: (i, 0)),
        ],
        out_specs=pl.BlockSpec((1, 8, 128), lambda i: (i, 0, 0)),
        compiler_params=pltpu.CompilerParams(
            dimension_semantics=("parallel",),
            vmem_limit_bytes=vmem_limit,
        ),
    )(logits, tgt2d)

    # Each tile's partial sum is broadcast across its (8,128) block; take one
    # representative per tile and finish the mean in XLA (negligible traffic).
    return jnp.sum(psums[:, 0, 0]) / n


if __name__ == "__main__":
    key = jax.random.PRNGKey(0)
    k_logits, k_tgt = jax.random.split(key)

    # small shapes: batch=8 samples, 32 classes
    N, C = 8, 32
    logits = jax.random.normal(k_logits, (N, C), dtype=jnp.float32)
    targets = jax.random.randint(k_tgt, (N,), 0, C, dtype=jnp.int32)

    loss_val = cross_entropy_loss(logits, targets)
    jax.block_until_ready(loss_val)

    # reference check in plain JAX (same math as F.cross_entropy, mean reduction)
    ref = jnp.mean(
        jax.nn.logsumexp(logits, axis=-1) - logits[jnp.arange(N), targets]
    )
    assert jnp.allclose(loss_val, ref, atol=1e-5, rtol=1e-5), (loss_val, ref)

    print("KERNEL_OK")
</pallas_src>

<mosaic_0001>
module attributes {stable_mosaic.version = 11 : i64} {
  func.func @_cross_entropy_kernel(%arg0: i32, %arg1: memref<8x32xf32, #tpu.memory_space<vmem>>, %arg2: memref<8x1xi32, #tpu.memory_space<vmem>>, %arg3: memref<1x8x128xf32, #tpu.memory_space<vmem>>) attributes {dimension_semantics = [#tpu.dimension_semantics<parallel>], iteration_bounds = array<i64: 1>, scalar_prefetch = 0 : i64, scratch_operands = 0 : i64, tpu.core_type = #tpu.core_type<tc>, window_params = [{transform_indices = @transform_0, window_bounds = array<i64: 8, 32>}, {transform_indices = @transform_1, window_bounds = array<i64: 8, 1>}, {transform_indices = @transform_2, window_bounds = array<i64: 1, 8, 128>}]} {
    %c0 = arith.constant 0 : index
    %c0_0 = arith.constant 0 : index
    %0 = vector.load %arg1[%c0, %c0_0] : memref<8x32xf32, #tpu.memory_space<vmem>>, vector<8x32xf32>
    %c0_1 = arith.constant 0 : index
    %c0_2 = arith.constant 0 : index
    %1 = vector.load %arg2[%c0_1, %c0_2] : memref<8x1xi32, #tpu.memory_space<vmem>>, vector<8x1xi32>
    %cst = arith.constant dense<0xFF800000> : vector<8xf32>
    %2 = vector.multi_reduction <maximumf>, %0, %cst [1] : vector<8x32xf32> to vector<8xf32>
    %3 = vector.shape_cast %2 : vector<8xf32> to vector<8x1xf32>
    %4 = vector.broadcast %3 : vector<8x1xf32> to vector<8x32xf32>
    %5 = arith.subf %0, %4 : vector<8x32xf32>
    %6 = math.exp %5 : vector<8x32xf32>
    %cst_3 = arith.constant dense<0.000000e+00> : vector<8xf32>
    %7 = vector.multi_reduction <add>, %6, %cst_3 [1] : vector<8x32xf32> to vector<8xf32>
    %8 = vector.shape_cast %7 : vector<8xf32> to vector<8x1xf32>
    %9 = tpu.iota {dimensions = array<i32: 1>} : vector<8x32xi32>
    %10 = vector.broadcast %1 : vector<8x1xi32> to vector<8x32xi32>
    %11 = arith.cmpi eq, %9, %10 : vector<8x32xi32>
    %cst_4 = arith.constant 0.000000e+00 : f32
    %12 = vector.broadcast %cst_4 : f32 to vector<8x32xf32>
    %13 = arith.select %11, %0, %12 : vector<8x32xi1>, vector<8x32xf32>
    %cst_5 = arith.constant dense<0.000000e+00> : vector<8xf32>
    %14 = vector.multi_reduction <add>, %13, %cst_5 [1] : vector<8x32xf32> to vector<8xf32>
    %15 = vector.shape_cast %14 : vector<8xf32> to vector<8x1xf32>
    %16 = math.log %8 : vector<8x1xf32>
    %17 = arith.addf %16, %3 : vector<8x1xf32>
    %18 = arith.subf %17, %15 : vector<8x1xf32>
    %19 = tpu.iota {dimensions = array<i32: 0>} : vector<8x1xi32>
    %c8_i32 = arith.constant 8 : i32
    %20 = arith.muli %arg0, %c8_i32 : i32
    %21 = vector.broadcast %20 : i32 to vector<8x1xi32>
    %22 = arith.addi %19, %21 : vector<8x1xi32>
    %c8_i32_6 = arith.constant 8 : i32
    %23 = vector.broadcast %c8_i32_6 : i32 to vector<8x1xi32>
    %24 = arith.cmpi slt, %22, %23 : vector<8x1xi32>
    %cst_7 = arith.constant 0.000000e+00 : f32
    %25 = vector.broadcast %cst_7 : f32 to vector<8x1xf32>
    %26 = arith.select %24, %18, %25 : vector<8x1xi1>, vector<8x1xf32>
    %27 = vector.shape_cast %26 : vector<8x1xf32> to vector<1x8x1xf32>
    %cst_8 = arith.constant dense<0.000000e+00> : vector<1xf32>
    %28 = vector.multi_reduction <add>, %27, %cst_8 [1, 2] : vector<1x8x1xf32> to vector<1xf32>
    %29 = vector.shape_cast %28 : vector<1xf32> to vector<1x1x1xf32>
    %30 = vector.extract %29[0, 0, 0] : f32 from vector<1x1x1xf32>
    %31 = vector.broadcast %30 : f32 to vector<1x8x128xf32>
    %c0_9 = arith.constant 0 : index
    %c0_10 = arith.constant 0 : index
    %c0_11 = arith.constant 0 : index
    %32 = vector.load %arg3[%c0_9, %c0_10, %c0_11] : memref<1x8x128xf32, #tpu.memory_space<vmem>>, vector<1x8x128xf32>
    tpu.vector_store %arg3[%c0_9, %c0_10, %c0_11], %31 {strides = array<i32>} : memref<1x8x128xf32, #tpu.memory_space<vmem>>, vector<1x8x128xf32>,
    return
  }
  func.func @transform_0(%arg0: i32) -> (i32, i32) {
    %c0_i32 = arith.constant 0 : i32
    %c0_i32_0 = arith.constant 0 : i32
    return %arg0, %c0_i32 : i32, i32
  }
  func.func @transform_1(%arg0: i32) -> (i32, i32) {
    %c0_i32 = arith.constant 0 : i32
    %c0_i32_0 = arith.constant 0 : i32
    return %arg0, %c0_i32 : i32, i32
  }
  func.func @transform_2(%arg0: i32) -> (i32, i32, i32) {
    %c0_i32 = arith.constant 0 : i32
    %c0_i32_0 = arith.constant 0 : i32
    %c0_i32_1 = arith.constant 0 : i32
    return %arg0, %c0_i32, %c0_i32_0 : i32, i32, i32
  }
}

</mosaic_0001>

<llo_original>
// kernel: tpu_custom_call.1
$region0: #{tpu_custom_call.1}
  #allocation0 [shape = 'u32[]', space=smem, size = 0x4, offset = 0x4, fixed_abs, tag = 'smem constant byte address 0x4 - core index']
  #allocation1 [shape = 'u32[72,128]{1,0:T(1,128)}', space=vmem, size = 0x9000, scoped, tag = 'internal scratch']
  %s0 = inlined_call_operand.vmem [shape: f32[8,32], index: 0, kind: input, shape index: {}]
  %s1 = inlined_call_operand.vmem [shape: s32[8,1], index: 1, kind: input, shape index: {}]
  %s2 = inlined_call_operand.hbm [shape: f32[1,8,128], index: 2, kind: output, shape index: {}]
  %s3 = sld [smem:[#allocation0]]
  $region18: #{tpu_custom_call.1} parent=0
    _
  %s5 = ssub.s32 1, %s3
  %s6 = scalar_select 0, %s5, %s3
  $region1: #{tpu_custom_call.1} parent=0
    #allocation2 [shape = 'u8[4096]{0}', space=vmem, size = 0x1000, scoped, tag = 'output window, operand 0, single buffered']
    #allocation3 [shape = 's32[1]{0}', space=sflag, size = 0x4, scoped, tag = 'scoped memory for tpu_custom_call.1']
    %7 = vsyncpa [#allocation3], 0
    // Predicated region
    $region2: #{tpu_custom_call.1} parent=1 // pred_check
      _
    $region3: #{tpu_custom_call.1} parent=1 // pred_check_branch
      %9 = sbr.rel (0) target = $region5
    $region4: #{tpu_custom_call.1} parent=1 // pred_region
      _
    $region5: #{tpu_custom_call.1} parent=1 // pred_fallthru
      _
    // Predicated region
    $region6: #{tpu_custom_call.1} parent=1 // pred_check
      _
    $region7: #{tpu_custom_call.1} parent=1 // pred_check_branch
      %11 = sbr.rel (0) target = $region9
    $region8: #{tpu_custom_call.1} parent=1 // pred_region
      _
    $region9: #{tpu_custom_call.1} parent=1 // pred_fallthru
      _
    %v12 = vld [vmem:[%s0] sm:$0xff]
    %v13 = vld [vmem:[%s1] sm:$0xff]
    %vm14 = vcmask 261120
    %v15 = vsel %vm14, %v12, -inf
    %16 = vmax.xlane.f32.xlu0 %v15
    %v17 = vpop.xlane.xlu0 %16
    %v18 = vsub.f32 %v12, %v17
    %v19 = vmul.f32 %v18, 1.442695
    %v20 = vpow.pop %v19
    %v21 = vsel %vm14, %v20, 0.0
    %22 = vadd.xlane.f32.xlu0 %v21
    %v23 = vpop.xlane.xlu0 %22
    %v24 = vlaneseq
    %v25 = vand.u32 %v24, 127
    %26 = vset.pattern.permute.xlu0 0
    %27 = vperm.xlu0 %26, %v13
    %v28 = vpop.permute.xlu0 %27
    %vm29 = vcmp.eq.s32.totalorder %v25, %v28
    %v30 = vsel %vm29, %v12, 0.0
    %v31 = vsel %vm14, %v30, 0.0
    %32 = vadd.xlane.f32.xlu0 %v31
    %v33 = vpop.xlane.xlu0 %32
    %v34 = vlog2.pop %v23
    %v35 = vmul.f32 %v34, 0.6931472
    %v36 = vadd.f32 %v35, %v17
    %v37 = vsub.f32 %v36, %v33
    %v38 = vlaneseq
    %v39 = vshrl.u32 %v38, 7
    %s40 = smul.u32 0, 8
    %v41 = vstv %s40
    %v42 = vadd.s32 %v39, %v41
    %vm43 = vcmp.lt.s32.totalorder %v42, 8
    %v44 = vsel %vm43, %v37, 0.0
    %vm45 = vcmask 7168
    %v46 = vsel %vm45, %v44, 0.0
    %47 = vadd.xlane.f32.xlu0 %v46
    %v48 = vpop.xlane.xlu0 %47
    %v49 = vrot.slane %v48, 4
    %v50 = vadd.f32 %v48, %v49
    %v51 = vrot.slane %v50, 2
    %v52 = vadd.f32 %v50, %v51
    %v53 = vrot.slane %v52, 1
    %v54 = vadd.f32 %v52, %v53
    %s55 = vtos %v54
    %v56 = vstv %s55
    %57 = vst [vmem:[#allocation2] sm:$0xff] %v56
    // Predicated region
    $region10: #{tpu_custom_call.1} parent=1 // pred_check
      _
    $region11: #{tpu_custom_call.1} parent=1 // pred_check_branch
      %59 = sbr.rel (0) target = $region13
    $region12: #{tpu_custom_call.1} parent=1 // pred_region
      %61 = vsyncadd [#allocation3], 0
      %s63 = sshll.u32 [#allocation2], 4
      %s64 = int_to_ptr.vmem [resolvable:$true] %s63
      %s65 = sshll.u32 %s2, 4
      %s66 = int_to_ptr.hbm [resolvable:$true] %s65
      %68 = dma.vmem_to_hbm [thread:$0]  %s64, 128, %s66, [#allocation3]
    $region13: #{tpu_custom_call.1} parent=1 // pred_fallthru
      _
    // Predicated region
    $region14: #{tpu_custom_call.1} parent=1 // pred_check
      _
    $region15: #{tpu_custom_call.1} parent=1 // pred_check_branch
      %70 = sbr.rel (0) target = $region17
    $region16: #{tpu_custom_call.1} parent=1 // pred_region
      %72 = dma.done [#allocation3], 128
    $region17: #{tpu_custom_call.1} parent=1 // pred_fallthru
      _
    %73 = vsyncpa [#allocation3], 1

</llo_original>
